<compile_context>
chip_gen: v7x
topology: tpu7x:2x2x1
jax: 0.10.0
libtpu: 0.0.40
codegen_flags: <defaults>
</compile_context>

<pallas_src>
import functools

import jax
import jax.numpy as jnp
from jax.experimental import pallas as pl
from jax.experimental.pallas import tpu as pltpu


def _round_up(n, m):
    return ((n + m - 1) // m) * m


def _cdiv(a, b):
    return -(-a // b)


def _mlp_kernel(x_ref, w1_ref, b1_ref, w2_ref, b2_ref, w3_ref, b3_ref, o_ref):
    # One batch tile per grid step; all three layers fused so intermediates
    # never touch HBM. x arrives f32 and is cast to bf16 on the VPU (hidden
    # under the DMA pipeline); MXU dots accumulate in f32.
    x = x_ref[...].astype(jnp.bfloat16)                                # (TB, D)
    h1 = jnp.dot(x, w1_ref[...], preferred_element_type=jnp.float32)   # MXU  (TB, 128)
    h1 = jnp.maximum(h1 + b1_ref[...], 0.0)                            # bias + relu (dropout1 = id)
    h2 = jnp.dot(h1.astype(jnp.bfloat16), w2_ref[...],
                 preferred_element_type=jnp.float32)                   # MXU  (TB, 64)
    h2 = jnp.maximum(h2 + b2_ref[...], 0.0)                            # bias + relu (dropout2 = id)
    # Final 64->1 layer on VPU/XLU: broadcast-mul + lane reduction, emitted as
    # a lane-dense (1, TB) row so the store is an unmasked vst.
    out_vec = jnp.sum(h2 * w3_ref[...], axis=-1)                       # (TB,)
    o_ref[...] = (out_vec[None, :] + b3_ref[...]).astype(o_ref.dtype)  # (1, TB)


@functools.partial(jax.jit, static_argnames=("tile_b",))
def regression_net_forward(x, params, *, tile_b=2048):
    """x: (B, input_size) f32. params: dict of (w1,b1,w2,b2,w3,b3)."""
    # Defensive normalization (no-ops for params from init_params; handles raw
    # PyTorch-exported (H,) biases / f32 weights).
    w1 = params["w1"].astype(jnp.bfloat16)
    w2 = params["w2"].astype(jnp.bfloat16)
    b1 = params["b1"].reshape(1, -1).astype(jnp.float32)
    b2 = params["b2"].reshape(1, -1).astype(jnp.float32)
    w3 = params["w3"].reshape(1, -1).astype(jnp.float32)   # (1, 64)
    b3 = params["b3"].reshape(1, 1).astype(jnp.float32)    # (1, 1)

    B, D = x.shape
    H1 = w1.shape[1]   # 128
    H2 = w2.shape[1]   # 64

    # --- batch tile selection -------------------------------------------------
    # Keep each (double-buffered) f32 x tile under ~8 MiB so the whole working
    # set fits v7x's smaller VMEM with headroom; cap at tile_b (v5e-friendly).
    vmem_x_budget = 8 * 1024 * 1024
    cap = max(256, (vmem_x_budget // (4 * D)) // 128 * 128)
    TB = min(tile_b, cap)
    if B <= TB:
        TB = _round_up(B, 8)            # single (possibly overhanging) tile
    num_tiles = _cdiv(B, TB)
    # v7x has 2 TCs: keep >= 2 parallel tiles when the batch is big enough.
    if num_tiles == 1 and B > 1024:
        TB = _round_up(_cdiv(B, 2), 8)
        num_tiles = _cdiv(B, TB)

    resident = lambda shape: pl.BlockSpec(shape, lambda i: (0, 0))  # VMEM-resident weights

    bytes_accessed = (B * D * 4                       # x (f32, read once)
                      + (D * H1 + H1 * H2) * 2        # bf16 weights
                      + (H1 + H2 + H2 + 1) * 4        # biases + w3 row
                      + num_tiles * TB * 4)           # output
    cost = pl.CostEstimate(
        flops=2 * B * (D * H1 + H1 * H2 + H2),
        transcendentals=0,
        bytes_accessed=bytes_accessed,
    )

    out2d = pl.pallas_call(
        _mlp_kernel,
        out_shape=jax.ShapeDtypeStruct((num_tiles, TB), jnp.float32),
        grid=(num_tiles,),
        in_specs=[
            pl.BlockSpec((TB, D), lambda i: (i, 0)),   # x: tiled over batch, f32
            resident((D, H1)), resident((1, H1)),      # w1 (bf16), b1 (f32)
            resident((H1, H2)), resident((1, H2)),     # w2 (bf16), b2 (f32)
            resident((1, H2)), resident((1, 1)),       # w3 row, b3 (f32)
        ],
        out_specs=pl.BlockSpec((1, TB), lambda i: (i, 0)),   # lane-dense row per tile
        compiler_params=pltpu.CompilerParams(
            dimension_semantics=("parallel",),
        ),
        cost_estimate=cost,
    )(x, w1, b1, w2, b2, w3, b3)

    # Undo the lane-dense layout; drop rows past B (clipped ragged last tile).
    return out2d.reshape(num_tiles * TB, 1)[:B]


def init_params(key, input_size):
    """nn.Linear-style init U(-1/sqrt(fan_in), 1/sqrt(fan_in)), stored kernel-ready."""
    def linear(k, fan_in, fan_out):
        kw, kb = jax.random.split(k)
        bound = 1.0 / jnp.sqrt(fan_in)
        w = jax.random.uniform(kw, (fan_in, fan_out), jnp.float32, -bound, bound)
        b = jax.random.uniform(kb, (1, fan_out), jnp.float32, -bound, bound)
        return w, b

    k1, k2, k3 = jax.random.split(key, 3)
    w1, b1 = linear(k1, input_size, 128)
    w2, b2 = linear(k2, 128, 64)
    w3, b3 = linear(k3, 64, 1)
    # Cast / reshape once here (not per forward call): MXU weights in bf16,
    # biases as (1, H) f32, final layer as a (1, 64) row + (1, 1) bias.
    return {
        "w1": w1.astype(jnp.bfloat16), "b1": b1,
        "w2": w2.astype(jnp.bfloat16), "b2": b2,
        "w3": w3.reshape(1, 64).astype(jnp.float32),
        "b3": b3.reshape(1, 1).astype(jnp.float32),
    }


def _reference(x, p):
    # Mirrors the kernel's bf16-operand / f32-accumulate numerics.
    xb = x.astype(jnp.bfloat16)
    h1 = jnp.maximum(
        jnp.dot(xb, p["w1"], preferred_element_type=jnp.float32) + p["b1"], 0.0)
    h2 = jnp.maximum(
        jnp.dot(h1.astype(jnp.bfloat16), p["w2"],
                preferred_element_type=jnp.float32) + p["b2"], 0.0)
    return jnp.sum(h2 * p["w3"], axis=-1, keepdims=True) + p["b3"]


if __name__ == "__main__":
    key = jax.random.PRNGKey(0)
    kx, kp, kx2 = jax.random.split(key, 3)

    batch, input_size = 8, 32
    params = init_params(kp, input_size)

    # Small single-tile case.
    x = jax.random.normal(kx, (batch, input_size), jnp.float32)
    out = jax.block_until_ready(regression_net_forward(x, params))
    ref = _reference(x, params)
    assert out.shape == (batch, 1), out.shape
    assert jnp.allclose(out, ref, atol=2e-3, rtol=2e-3), "mismatch vs reference (small)"

    # Ragged multi-tile case (exercises parallel grid + clipped last block).
    batch2 = 2500
    x2 = jax.random.normal(kx2, (batch2, input_size), jnp.float32)
    out2 = jax.block_until_ready(regression_net_forward(x2, params))
    ref2 = _reference(x2, params)
    assert out2.shape == (batch2, 1), out2.shape
    assert jnp.allclose(out2, ref2, atol=2e-3, rtol=2e-3), "mismatch vs reference (ragged)"

    print("KERNEL_OK")
</pallas_src>

<mosaic_0001>
module attributes {stable_mosaic.version = 11 : i64} {
  func.func @_mlp_kernel(%arg0: i32, %arg1: memref<8x32xf32, #tpu.memory_space<vmem>>, %arg2: memref<32x128xbf16, #tpu.memory_space<vmem>>, %arg3: memref<1x128xf32, #tpu.memory_space<vmem>>, %arg4: memref<128x64xbf16, #tpu.memory_space<vmem>>, %arg5: memref<1x64xf32, #tpu.memory_space<vmem>>, %arg6: memref<1x64xf32, #tpu.memory_space<vmem>>, %arg7: memref<1x1xf32, #tpu.memory_space<vmem>>, %arg8: memref<1x8xf32, #tpu.memory_space<vmem>>) attributes {dimension_semantics = [#tpu.dimension_semantics<parallel>], iteration_bounds = array<i64: 1>, scalar_prefetch = 0 : i64, scratch_operands = 0 : i64, tpu.core_type = #tpu.core_type<tc>, window_params = [{transform_indices = @transform_0, window_bounds = array<i64: 8, 32>}, {pipeline_mode = #tpu.pipeline_mode<synchronous>, transform_indices = @transform_1, window_bounds = array<i64: 32, 128>}, {pipeline_mode = #tpu.pipeline_mode<synchronous>, transform_indices = @transform_2, window_bounds = array<i64: 1, 128>}, {pipeline_mode = #tpu.pipeline_mode<synchronous>, transform_indices = @transform_3, window_bounds = array<i64: 128, 64>}, {pipeline_mode = #tpu.pipeline_mode<synchronous>, transform_indices = @transform_4, window_bounds = array<i64: 1, 64>}, {pipeline_mode = #tpu.pipeline_mode<synchronous>, transform_indices = @transform_5, window_bounds = array<i64: 1, 64>}, {pipeline_mode = #tpu.pipeline_mode<synchronous>, transform_indices = @transform_6, window_bounds = array<i64: 1, 1>}, {transform_indices = @transform_7, window_bounds = array<i64: 1, 8>}]} {
    %c0 = arith.constant 0 : index
    %c0_0 = arith.constant 0 : index
    %0 = vector.load %arg1[%c0, %c0_0] : memref<8x32xf32, #tpu.memory_space<vmem>>, vector<8x32xf32>
    %1 = arith.truncf %0 : vector<8x32xf32> to vector<8x32xbf16>
    %c0_1 = arith.constant 0 : index
    %c0_2 = arith.constant 0 : index
    %2 = vector.load %arg2[%c0_1, %c0_2] : memref<32x128xbf16, #tpu.memory_space<vmem>>, vector<32x128xbf16>
    %cst = arith.constant dense<0.000000e+00> : vector<8x128xf32>
    %3 = tpu.matmul %1, %2, %cst {dimension_numbers = #tpu.dot_dimension_numbers<[1], [0], [0], [1], [0, 0, 1, 1], [], []>} : vector<8x32xbf16>, vector<32x128xbf16>, vector<8x128xf32> -> vector<8x128xf32>
    %c0_3 = arith.constant 0 : index
    %c0_4 = arith.constant 0 : index
    %4 = vector.load %arg3[%c0_3, %c0_4] : memref<1x128xf32, #tpu.memory_space<vmem>>, vector<1x128xf32>
    %5 = vector.broadcast %4 : vector<1x128xf32> to vector<8x128xf32>
    %6 = arith.addf %3, %5 : vector<8x128xf32>
    %cst_5 = arith.constant 0.000000e+00 : f32
    %7 = vector.broadcast %cst_5 : f32 to vector<8x128xf32>
    %8 = arith.maximumf %6, %7 : vector<8x128xf32>
    %9 = arith.truncf %8 : vector<8x128xf32> to vector<8x128xbf16>
    %c0_6 = arith.constant 0 : index
    %c0_7 = arith.constant 0 : index
    %10 = vector.load %arg4[%c0_6, %c0_7] : memref<128x64xbf16, #tpu.memory_space<vmem>>, vector<128x64xbf16>
    %cst_8 = arith.constant dense<0.000000e+00> : vector<8x64xf32>
    %11 = tpu.matmul %9, %10, %cst_8 {dimension_numbers = #tpu.dot_dimension_numbers<[1], [0], [0], [1], [0, 0, 1, 1], [], []>} : vector<8x128xbf16>, vector<128x64xbf16>, vector<8x64xf32> -> vector<8x64xf32>
    %c0_9 = arith.constant 0 : index
    %c0_10 = arith.constant 0 : index
    %12 = vector.load %arg5[%c0_9, %c0_10] : memref<1x64xf32, #tpu.memory_space<vmem>>, vector<1x64xf32>
    %13 = vector.broadcast %12 : vector<1x64xf32> to vector<8x64xf32>
    %14 = arith.addf %11, %13 : vector<8x64xf32>
    %cst_11 = arith.constant 0.000000e+00 : f32
    %15 = vector.broadcast %cst_11 : f32 to vector<8x64xf32>
    %16 = arith.maximumf %14, %15 : vector<8x64xf32>
    %c0_12 = arith.constant 0 : index
    %c0_13 = arith.constant 0 : index
    %17 = vector.load %arg6[%c0_12, %c0_13] : memref<1x64xf32, #tpu.memory_space<vmem>>, vector<1x64xf32>
    %18 = vector.broadcast %17 : vector<1x64xf32> to vector<8x64xf32>
    %19 = arith.mulf %16, %18 : vector<8x64xf32>
    %cst_14 = arith.constant dense<0.000000e+00> : vector<8xf32>
    %20 = vector.multi_reduction <add>, %19, %cst_14 [1] : vector<8x64xf32> to vector<8xf32>
    %21 = vector.shape_cast %20 : vector<8xf32> to vector<1x8xf32>
    %c0_15 = arith.constant 0 : index
    %c0_16 = arith.constant 0 : index
    %22 = vector.load %arg7[%c0_15, %c0_16] : memref<1x1xf32, #tpu.memory_space<vmem>>, vector<1x1xf32>
    %23 = vector.broadcast %22 : vector<1x1xf32> to vector<1x8xf32>
    %24 = arith.addf %21, %23 : vector<1x8xf32>
    %c0_17 = arith.constant 0 : index
    %c0_18 = arith.constant 0 : index
    %25 = vector.load %arg8[%c0_17, %c0_18] : memref<1x8xf32, #tpu.memory_space<vmem>>, vector<1x8xf32>
    tpu.vector_store %arg8[%c0_17, %c0_18], %24 {strides = array<i32>} : memref<1x8xf32, #tpu.memory_space<vmem>>, vector<1x8xf32>,
    return
  }
  func.func @transform_0(%arg0: i32) -> (i32, i32) {
    %c0_i32 = arith.constant 0 : i32
    %c0_i32_0 = arith.constant 0 : i32
    return %arg0, %c0_i32 : i32, i32
  }
  func.func @transform_1(%arg0: i32) -> (i32, i32) {
    %c0_i32 = arith.constant 0 : i32
    %c0_i32_0 = arith.constant 0 : i32
    %c0_i32_1 = arith.constant 0 : i32
    return %c0_i32, %c0_i32_0 : i32, i32
  }
  func.func @transform_2(%arg0: i32) -> (i32, i32) {
    %c0_i32 = arith.constant 0 : i32
    %c0_i32_0 = arith.constant 0 : i32
    %c0_i32_1 = arith.constant 0 : i32
    return %c0_i32, %c0_i32_0 : i32, i32
  }
  func.func @transform_3(%arg0: i32) -> (i32, i32) {
    %c0_i32 = arith.constant 0 : i32
    %c0_i32_0 = arith.constant 0 : i32
    %c0_i32_1 = arith.constant 0 : i32
    return %c0_i32, %c0_i32_0 : i32, i32
  }
  func.func @transform_4(%arg0: i32) -> (i32, i32) {
    %c0_i32 = arith.constant 0 : i32
    %c0_i32_0 = arith.constant 0 : i32
    %c0_i32_1 = arith.constant 0 : i32
    return %c0_i32, %c0_i32_0 : i32, i32
  }
  func.func @transform_5(%arg0: i32) -> (i32, i32) {
    %c0_i32 = arith.constant 0 : i32
    %c0_i32_0 = arith.constant 0 : i32
    %c0_i32_1 = arith.constant 0 : i32
    return %c0_i32, %c0_i32_0 : i32, i32
  }
  func.func @transform_6(%arg0: i32) -> (i32, i32) {
    %c0_i32 = arith.constant 0 : i32
    %c0_i32_0 = arith.constant 0 : i32
    %c0_i32_1 = arith.constant 0 : i32
    return %c0_i32, %c0_i32_0 : i32, i32
  }
  func.func @transform_7(%arg0: i32) -> (i32, i32) {
    %c0_i32 = arith.constant 0 : i32
    %c0_i32_0 = arith.constant 0 : i32
    return %arg0, %c0_i32 : i32, i32
  }
}

</mosaic_0001>

<llo_original>
// kernel: regression_net_forward.1
$region0: #{regression_net_forward.1}
  #allocation0 [shape = 'u32[]', space=smem, size = 0x4, offset = 0x4, fixed_abs, tag = 'smem constant byte address 0x4 - core index']
  #allocation1 [shape = 'u32[144,128]{1,0:T(1,128)}', space=vmem, size = 0x12000, scoped, tag = 'internal scratch']
  #allocation2 [shape = 'f32[1,1]{1,0:T(1,128)S(1)}', space=vmem, size = 0x200, scoped, tag = 'scoped memory for regression_net_forward.1']
  %s0 = inlined_call_operand.vmem [shape: f32[8,32], index: 0, kind: input, shape index: {}]
  %s1 = inlined_call_operand.vmem [shape: bf16[32,128], index: 1, kind: input, shape index: {}]
  %s2 = inlined_call_operand.vmem [shape: f32[1,128], index: 2, kind: input, shape index: {}]
  %s3 = inlined_call_operand.vmem [shape: bf16[128,64], index: 3, kind: input, shape index: {}]
  %s4 = inlined_call_operand.vmem [shape: f32[1,64], index: 4, kind: input, shape index: {}]
  %s5 = inlined_call_operand.vmem [shape: f32[1,64], index: 5, kind: input, shape index: {}]
  %s6 = inlined_call_operand.<no memory space> [shape: f32[1,1], index: 6, kind: input, shape index: {}]
  %s7 = inlined_call_operand.hbm [shape: f32[1,8], index: 7, kind: output, shape index: {}]
  %s8 = sld [smem:[#allocation0]]
  $region38: #{regression_net_forward.1} parent=0
    _
  %s10 = ssub.s32 1, %s8
  %s11 = scalar_select 0, %s10, %s8
  %v12 = vstv %s6
  %13 = vst [vmem:[#allocation2] sm:$0x1] %v12
  $region1: #{regression_net_forward.1} parent=0
    #allocation3 [shape = 'u8[512]{0}', space=vmem, size = 0x400, scoped, tag = 'output window, operand 0, single buffered']
    #allocation4 [shape = 's32[1]{0}', space=sflag, size = 0x4, scoped, tag = 'scoped memory for regression_net_forward.1']
    %14 = vsyncpa [#allocation4], 0
    // Predicated region
    $region2: #{regression_net_forward.1} parent=1 // pred_check
      _
    $region3: #{regression_net_forward.1} parent=1 // pred_check_branch
      %16 = sbr.rel (0) target = $region5
    $region4: #{regression_net_forward.1} parent=1 // pred_region
      _
    $region5: #{regression_net_forward.1} parent=1 // pred_fallthru
      _
    // Predicated region
    $region6: #{regression_net_forward.1} parent=1 // pred_check
      _
    $region7: #{regression_net_forward.1} parent=1 // pred_check_branch
      %18 = sbr.rel (0) target = $region9
    $region8: #{regression_net_forward.1} parent=1 // pred_region
      _
    $region9: #{regression_net_forward.1} parent=1 // pred_fallthru
      _
    // Predicated region
    $region10: #{regression_net_forward.1} parent=1 // pred_check
      _
    $region11: #{regression_net_forward.1} parent=1 // pred_check_branch
      %20 = sbr.rel (0) target = $region13
    $region12: #{regression_net_forward.1} parent=1 // pred_region
      _
    $region13: #{regression_net_forward.1} parent=1 // pred_fallthru
      _
    // Predicated region
    $region14: #{regression_net_forward.1} parent=1 // pred_check
      _
    $region15: #{regression_net_forward.1} parent=1 // pred_check_branch
      %22 = sbr.rel (0) target = $region17
    $region16: #{regression_net_forward.1} parent=1 // pred_region
      _
    $region17: #{regression_net_forward.1} parent=1 // pred_fallthru
      _
    // Predicated region
    $region18: #{regression_net_forward.1} parent=1 // pred_check
      _
    $region19: #{regression_net_forward.1} parent=1 // pred_check_branch
      %24 = sbr.rel (0) target = $region21
    $region20: #{regression_net_forward.1} parent=1 // pred_region
      _
    $region21: #{regression_net_forward.1} parent=1 // pred_fallthru
      _
    // Predicated region
    $region22: #{regression_net_forward.1} parent=1 // pred_check
      _
    $region23: #{regression_net_forward.1} parent=1 // pred_check_branch
      %26 = sbr.rel (0) target = $region25
    $region24: #{regression_net_forward.1} parent=1 // pred_region
      _
    $region25: #{regression_net_forward.1} parent=1 // pred_fallthru
      _
    // Predicated region
    $region26: #{regression_net_forward.1} parent=1 // pred_check
      _
    $region27: #{regression_net_forward.1} parent=1 // pred_check_branch
      %28 = sbr.rel (0) target = $region29
    $region28: #{regression_net_forward.1} parent=1 // pred_region
      _
    $region29: #{regression_net_forward.1} parent=1 // pred_fallthru
      _
    %v30 = vld [vmem:[%s0] sm:$0xff]
    %v31 = vpack.c.bf16 %v30, %v30
    %v32 = vld [vmem:[%s1] sm:$0xf]
    %v33 = vld [vmem:[%s1 + $0x4] sm:$0xf]
    %v34 = vld [vmem:[%s1 + $0x8] sm:$0xf]
    %v35 = vld [vmem:[%s1 + $0xc] sm:$0xf]
    %v36 = vld [vmem:[%s2] sm:$0x1]
    %v38 = vlaneseq
    %v39 = vshrl.u32 %v38, 7
    %v40 = vsub.s32 0, %v39
    %v41 = vrot.slane %v36, %v40
    %v47 = vunpack.c.l.b16 %v32
    %v48 = vunpack.c.l.b16 %v33
    %v49 = vunpack.c.l.b16 %v34
    %v50 = vunpack.c.l.b16 %v35
    %v51 = vpack.c.b16 %v48, %v47
    %v52 = vpack.c.b16 %v50, %v49
    %vm55 = vcmask 261120
    %v57 = vsel %vm55, %v31, 0
    %59 = vmatprep.subr.bf16.mxu0 0
    %60 = vmatpush1.bf16.msra.mxu0 %v51
    %61 = vmatprep.subr.bf16.mxu0 0
    %62 = vmatpush1.bf16.msra.mxu0 %v52
    %63 = vmatprep.subr.bf16.mxu0 0
    %64 = vmatpush1.bf16.msra.mxu0 0
    %65 = vmatprep.subr.bf16.mxu0 0
    %66 = vmatpush1.bf16.msra.mxu0 0
    %67 = vmatprep.subr.bf16.mxu0 0
    %68 = vmatpush1.bf16.msra.mxu0 0
    %69 = vmatprep.subr.bf16.mxu0 0
    %70 = vmatpush1.bf16.msra.mxu0 0
    %71 = vmatprep.subr.bf16.mxu0 0
    %72 = vmatpush1.bf16.msra.mxu0 0
    %73 = vmatprep.subr.bf16.mxu0 0
    %74 = vmatpush1.bf16.msra.mxu0 0
    %75 = vmatprep.subr.bf16.mxu0 0
    %76 = vmatpush1.bf16.msra.mxu0 0
    %77 = vmatprep.subr.bf16.mxu0 0
    %78 = vmatpush1.bf16.msra.mxu0 0
    %79 = vmatprep.subr.bf16.mxu0 0
    %80 = vmatpush1.bf16.msra.mxu0 0
    %81 = vmatprep.subr.bf16.mxu0 0
    %82 = vmatpush1.bf16.msra.mxu0 0
    %83 = vmatprep.subr.bf16.mxu0 0
    %84 = vmatpush1.bf16.msra.mxu0 0
    %85 = vmatprep.subr.bf16.mxu0 0
    %86 = vmatpush1.bf16.msra.mxu0 0
    %87 = vmatprep.subr.bf16.mxu0 0
    %88 = vmatpush1.bf16.msra.mxu0 0
    %89 = vmatprep.subr.bf16.mxu0 0
    %90 = vmatpush1.bf16.msra.mxu0 0
    %91 = vmatprep.mubr.bf16.mxu0 0
    %92 = vmatmul.mubr.bf16.gmra.mrb[0].mxu0 %v57
    %v93 = vpop.f32.mrb[0].mxu0
    %v94 = vadd.f32 %v41, %v93
    %v95 = vpop.f32.mrb[0].mxu0
    %v96 = vpop.f32.mrb[0].mxu0
    %v97 = vpop.f32.mrb[0].mxu0
    %98 = vdwg.mxu0
    %v99 = vmax.f32 %v94, 0.0
    %v100 = vpack.c.bf16 %v99, %v99
    %v101 = vld [vmem:[%s3] sm:$0xf]
    %v102 = vld [vmem:[%s3 + $0x4] sm:$0xf]
    %v103 = vld [vmem:[%s3 + $0x8] sm:$0xf]
    %v104 = vld [vmem:[%s3 + $0xc] sm:$0xf]
    %v105 = vld [vmem:[%s3 + $0x10] sm:$0xf]
    %v106 = vld [vmem:[%s3 + $0x14] sm:$0xf]
    %v107 = vld [vmem:[%s3 + $0x18] sm:$0xf]
    %v108 = vld [vmem:[%s3 + $0x1c] sm:$0xf]
    %v109 = vld [vmem:[%s3 + $0x20] sm:$0xf]
    %v110 = vld [vmem:[%s3 + $0x24] sm:$0xf]
    %v111 = vld [vmem:[%s3 + $0x28] sm:$0xf]
    %v112 = vld [vmem:[%s3 + $0x2c] sm:$0xf]
    %v113 = vld [vmem:[%s3 + $0x30] sm:$0xf]
    %v114 = vld [vmem:[%s3 + $0x34] sm:$0xf]
    %v115 = vld [vmem:[%s3 + $0x38] sm:$0xf]
    %v116 = vld [vmem:[%s3 + $0x3c] sm:$0xf]
    %v117 = vld [vmem:[%s4] sm:$0x1]
    %v119 = vlaneseq
    %v120 = vshrl.u32 %v119, 7
    %v121 = vsub.s32 0, %v120
    %v122 = vrot.slane %v117, %v121
    %v140 = vunpack.c.l.b16 %v101
    %v141 = vunpack.c.l.b16 %v102
    %v142 = vunpack.c.l.b16 %v103
    %v143 = vunpack.c.l.b16 %v104
    %v144 = vunpack.c.l.b16 %v105
    %v145 = vunpack.c.l.b16 %v106
    %v146 = vunpack.c.l.b16 %v107
    %v147 = vunpack.c.l.b16 %v108
    %v148 = vunpack.c.l.b16 %v109
    %v149 = vunpack.c.l.b16 %v110
    %v150 = vunpack.c.l.b16 %v111
    %v151 = vunpack.c.l.b16 %v112
    %v152 = vunpack.c.l.b16 %v113
    %v153 = vunpack.c.l.b16 %v114
    %v154 = vunpack.c.l.b16 %v115
    %v155 = vunpack.c.l.b16 %v116
    %v156 = vpack.c.b16 %v141, %v140
    %v157 = vpack.c.b16 %v143, %v142
    %v158 = vpack.c.b16 %v145, %v144
    %v159 = vpack.c.b16 %v147, %v146
    %v160 = vpack.c.b16 %v149, %v148
    %v161 = vpack.c.b16 %v151, %v150
    %v162 = vpack.c.b16 %v153, %v152
    %v163 = vpack.c.b16 %v155, %v154
    %172 = vmatprep.subr.bf16.mxu0 0
    %173 = vmatpush1.bf16.msra.mxu0 %v156
    %174 = vmatprep.subr.bf16.mxu0 0
    %175 = vmatpush1.bf16.msra.mxu0 %v157
    %176 = vmatprep.subr.bf16.mxu0 0
    %177 = vmatpush1.bf16.msra.mxu0 %v158
    %178 = vmatprep.subr.bf16.mxu0 0
    %179 = vmatpush1.bf16.msra.mxu0 %v159
    %180 = vmatprep.subr.bf16.mxu0 0
    %181 = vmatpush1.bf16.msra.mxu0 %v160
    %182 = vmatprep.subr.bf16.mxu0 0
    %183 = vmatpush1.bf16.msra.mxu0 %v161
    %184 = vmatprep.subr.bf16.mxu0 0
    %185 = vmatpush1.bf16.msra.mxu0 %v162
    %186 = vmatprep.subr.bf16.mxu0 0
    %187 = vmatpush1.bf16.msra.mxu0 %v163
    %188 = vmatprep.subr.bf16.mxu0 0
    %189 = vmatpush1.bf16.msra.mxu0 0
    %190 = vmatprep.subr.bf16.mxu0 0
    %191 = vmatpush1.bf16.msra.mxu0 0
    %192 = vmatprep.subr.bf16.mxu0 0
    %193 = vmatpush1.bf16.msra.mxu0 0
    %194 = vmatprep.subr.bf16.mxu0 0
    %195 = vmatpush1.bf16.msra.mxu0 0
    %196 = vmatprep.subr.bf16.mxu0 0
    %197 = vmatpush1.bf16.msra.mxu0 0
    %198 = vmatprep.subr.bf16.mxu0 0
    %199 = vmatpush1.bf16.msra.mxu0 0
    %200 = vmatprep.subr.bf16.mxu0 0
    %201 = vmatpush1.bf16.msra.mxu0 0
    %202 = vmatprep.subr.bf16.mxu0 0
    %203 = vmatpush1.bf16.msra.mxu0 0
    %204 = vmatprep.mubr.bf16.mxu0 0
    %205 = vmatmul.mubr.bf16.gmra.mrb[0].mxu0 %v100
    %v206 = vpop.f32.mrb[0].mxu0
    %v207 = vadd.f32 %v122, %v206
    %v208 = vpop.f32.mrb[0].mxu0
    %v209 = vpop.f32.mrb[0].mxu0
    %v210 = vpop.f32.mrb[0].mxu0
    %211 = vdwg.mxu0
    %v212 = vmax.f32 %v207, 0.0
    %v213 = vld [vmem:[%s5] sm:$0x1]
    %v215 = vlaneseq
    %v216 = vshrl.u32 %v215, 7
    %v217 = vsub.s32 0, %v216
    %v218 = vrot.slane %v213, %v217
    %v220 = vmul.f32 %v212, %v218
    %vm221 = vcmask 523264
    %v222 = vsel %vm221, %v220, 0.0
    %223 = vadd.xlane.f32.xlu0 %v222
    %v224 = vpop.xlane.xlu0 %223
    %v225 = vld [vmem:[#allocation2] sm:$0x1]
    %227 = vset.pattern.permute.xlu0 0
    %228 = vperm.xlu0 %227, %v225
    %v229 = vpop.permute.xlu0 %228
    %v231 = vlaneseq
    %v232 = vshrl.u32 %v231, 7
    %v233 = vsub.s32 0, %v232
    %v234 = vrot.slane %v229, %v233
    %v235 = vadd.f32 %v224, %v234
    %v237 = vlaneseq
    %v238 = vand.u32 %v237, 127
    %v239 = vlaneseq
    %v240 = vshrl.u32 %v239, 7
    %v241 = vsub.s32 %v238, %v240
    %v242 = vrot.slane %v235, %v241
    %vm244 = vcmask 57344
    %245 = vst.msk [vmem:[#allocation3] sm:$0x1] %vm244, %v242
    // Predicated region
    $region30: #{regression_net_forward.1} parent=1 // pred_check
      _
    $region31: #{regression_net_forward.1} parent=1 // pred_check_branch
      %247 = sbr.rel (0) target = $region33
    $region32: #{regression_net_forward.1} parent=1 // pred_region
      %s249 = ssub.s32 16, 16
      %250 = vsyncadd [#allocation4], %s249
      %s252 = sshll.u32 [#allocation3], 4
      %s253 = int_to_ptr.vmem [resolvable:$true] %s252
      %255 = dma.vmem_to_hbm [thread:$0]  %s253, 16, %s7, [#allocation4]
    $region33: #{regression_net_forward.1} parent=1 // pred_fallthru
      _
    // Predicated region
    $region34: #{regression_net_forward.1} parent=1 // pred_check
      _
    $region35: #{regression_net_forward.1} parent=1 // pred_check_branch
      %257 = sbr.rel (0) target = $region37
    $region36: #{regression_net_forward.1} parent=1 // pred_region
      %258 = dma.done [#allocation4], 16
    $region37: #{regression_net_forward.1} parent=1 // pred_fallthru
      _
    %259 = vsyncpa [#allocation4], 1

</llo_original>
